<compile_context>
chip_gen: v7x
topology: tpu7x:2x2x1
jax: 0.10.0
libtpu: 0.0.40
codegen_flags: <defaults>
</compile_context>

<pallas_src>
import jax
import jax.numpy as jnp
from jax.experimental import pallas as pl
from jax.experimental.pallas import tpu as pltpu


def _sigmoid_1pass(x):
    # sigmoid(x) == 0.5 * tanh(0.5 * x) + 0.5
    # -> single EUP pass (tanh) instead of exp + reciprocal; mul/add go to the
    #    VPU whose slots are idle on this latency-bound path.
    return 0.5 * jnp.tanh(0.5 * x) + 0.5


# ----------------------------- Pallas kernel ------------------------------- #
def _lstm_policy_kernel(t_last_ref,   # SMEM (1,) int32: max(lengths) - 1
                        x_ref,        # VMEM (T*B, E)  bf16 time-major embeddings
                        sel_ref,      # VMEM (B, 1)    f32, 1.0 iff lengths[b]==max(lengths)
                        wih_ref,      # VMEM (E, 4H)   bf16
                        whh_ref,      # VMEM (H, 4H)   bf16
                        b_ref,        # VMEM (1, 4H)   f32  (b_ih + b_hh)
                        wfc_ref,      # VMEM (H, V)    bf16
                        bfc_ref,      # VMEM (1, V)    f32
                        out_ref,      # VMEM (B, V)    f32 softmax probabilities
                        xproj_sc):    # VMEM scratch (T*B, 4H) f32
    B = sel_ref.shape[0]
    H = whh_ref.shape[0]

    # Input projection for ALL time steps in one MXU call; bias hoisted out of
    # the recurrence loop.
    xproj_sc[...] = (
        jnp.dot(x_ref[...], wih_ref[...], preferred_element_type=jnp.float32)
        + b_ref[...])

    # Serial recurrence: only h @ W_hh remains per step.  Run exactly
    # max(lengths) steps (skip trailing padded steps).
    n_steps = t_last_ref[0] + 1

    def step(t, carry):
        h, c = carry                                    # f32 (B, H) each
        off = pl.multiple_of(t * B, B)
        # NOTE: bf16 h into the recurrent matmul (f32 accumulation) is within
        # tolerance at demo T; for very long sequences keep h/W_hh f32 here.
        gates = xproj_sc[pl.ds(off, B), :] + jnp.dot(
            h.astype(whh_ref.dtype), whh_ref[...],
            preferred_element_type=jnp.float32)         # (B, 4H) f32
        # PyTorch LSTM gate order: i, f, g, o
        i_g = _sigmoid_1pass(gates[:, 0 * H:1 * H])
        f_g = _sigmoid_1pass(gates[:, 1 * H:2 * H])
        g_g = jnp.tanh(gates[:, 2 * H:3 * H])
        o_g = _sigmoid_1pass(gates[:, 3 * H:4 * H])
        c = f_g * c + i_g * g_g
        h = o_g * jnp.tanh(c)
        return (h, c)

    h0 = jnp.zeros((B, H), jnp.float32)
    c0 = jnp.zeros((B, H), jnp.float32)
    h_last, _ = jax.lax.fori_loop(0, n_steps, step, (h0, c0))

    # Finalize: mask rows whose length < max(lengths) (pad_packed_sequence
    # zero-padding), then fc + softmax (all f32 accumulation).
    h_fin = h_last * sel_ref[...]
    logits = (jnp.dot(h_fin.astype(wfc_ref.dtype), wfc_ref[...],
                      preferred_element_type=jnp.float32) + bfc_ref[...])
    m = jnp.max(logits, axis=-1, keepdims=True)
    e = jnp.exp(logits - m)
    denom = jnp.sum(e, axis=-1, keepdims=True)
    # approx EUP reciprocal + one Newton step (VPU) ~ exact, cheaper than divide
    r = pl.reciprocal(denom, approx=True)
    r = r * (2.0 - denom * r)
    out_ref[...] = e * r


# ------------------------------ host wrapper ------------------------------- #
def lstm_policy_forward(x_tokens, lengths, params):
    """x_tokens: (B, T) int32 token ids; lengths: (B,) int32."""
    emb_tbl = params["emb"]          # (V, E) bf16 (built in bf16 -> gather emits bf16)
    W_ih = params["W_ih"]            # (E, 4H) f32
    W_hh = params["W_hh"]            # (H, 4H) f32
    b = params["b"]                  # (1, 4H) f32
    W_fc = params["W_fc"]            # (H, V)  f32
    b_fc = params["b_fc"]            # (1, V)  f32

    B, T = x_tokens.shape
    E = emb_tbl.shape[1]
    H = W_hh.shape[0]
    V = W_fc.shape[1]

    # Glue: embedding gather directly in time-major flattened layout (T*B, E).
    # Only the tiny (B, T) id matrix is transposed, never the embedded tensor,
    # and the table is already bf16 so there is no post-gather convert pass.
    ids_tm = jnp.transpose(x_tokens).reshape(-1)
    x_flat = jnp.take(emb_tbl, ids_tm, axis=0)                        # (T*B, E) bf16

    t_eff = jnp.max(lengths)
    t_last = (t_eff - 1).astype(jnp.int32).reshape(1)                 # SMEM scalar
    sel = (lengths == t_eff).astype(jnp.float32).reshape(B, 1)        # (B, 1)

    # Explicit VMEM budget: operands + scratch + output, with headroom, well
    # under v7x's 64 MiB physical VMEM (v5e/v6e have 128 MiB).
    vmem_need = (
        T * B * E * 2 +            # x_flat bf16
        B * 4 +                    # sel f32
        E * 4 * H * 2 +            # W_ih bf16
        H * 4 * H * 2 +            # W_hh bf16
        4 * H * 4 +                # b f32
        H * V * 2 +                # W_fc bf16
        V * 4 +                    # b_fc f32
        B * V * 4 +                # out f32
        T * B * 4 * H * 4)         # xproj scratch f32
    vmem_limit = min(48 << 20, max(16 << 20, 2 * vmem_need + (4 << 20)))

    def vmem():
        return pl.BlockSpec(memory_space=pltpu.MemorySpace.VMEM)

    return pl.pallas_call(
        _lstm_policy_kernel,
        out_shape=jax.ShapeDtypeStruct((B, V), jnp.float32),
        in_specs=[
            pl.BlockSpec(memory_space=pltpu.MemorySpace.SMEM),  # t_last
            vmem(),   # x  (T*B, E) bf16
            vmem(),   # sel
            vmem(),   # W_ih bf16
            vmem(),   # W_hh bf16
            vmem(),   # b (f32)
            vmem(),   # W_fc bf16
            vmem(),   # b_fc (f32)
        ],
        out_specs=vmem(),
        scratch_shapes=[pltpu.VMEM((T * B, 4 * H), jnp.float32)],
        compiler_params=pltpu.CompilerParams(vmem_limit_bytes=int(vmem_limit)),
    )(t_last, x_flat, sel,
      W_ih.astype(jnp.bfloat16), W_hh.astype(jnp.bfloat16), b,
      W_fc.astype(jnp.bfloat16), b_fc)


# ------------------------------ pure-JAX ref -------------------------------- #
def lstm_policy_ref(x_tokens, lengths, params):
    emb = jnp.take(params["emb"], x_tokens, axis=0).astype(jnp.float32)  # (B, T, E)
    B, T, _ = emb.shape
    H = params["W_hh"].shape[0]

    def step(carry, x_t):
        h, c = carry
        gates = x_t @ params["W_ih"] + h @ params["W_hh"] + params["b"]
        i = jax.nn.sigmoid(gates[:, 0 * H:1 * H])
        f = jax.nn.sigmoid(gates[:, 1 * H:2 * H])
        g = jnp.tanh(gates[:, 2 * H:3 * H])
        o = jax.nn.sigmoid(gates[:, 3 * H:4 * H])
        c = f * c + i * g
        h = o * jnp.tanh(c)
        return (h, c), h

    init = (jnp.zeros((B, H), jnp.float32), jnp.zeros((B, H), jnp.float32))
    _, hs = jax.lax.scan(step, init, jnp.transpose(emb, (1, 0, 2)))
    t_eff = jnp.max(lengths)
    h_last = hs[t_eff - 1] * (lengths == t_eff).astype(jnp.float32)[:, None]
    logits = h_last @ params["W_fc"] + params["b_fc"]
    return jax.nn.softmax(logits, axis=-1)


# ---------------------------------- main ------------------------------------ #
def make_params(key, vocab_size, embedding_dim, hidden_dim):
    ks = jax.random.split(key, 7)
    s = 0.05
    return {
        # embedding table kept in bf16 so the host-side gather emits bf16
        # directly (no (T*B, E) convert pass / extra HBM traffic per call).
        "emb":  (s * jax.random.normal(ks[0], (vocab_size, embedding_dim),
                                       jnp.float32)).astype(jnp.bfloat16),
        "W_ih": s * jax.random.normal(ks[1], (embedding_dim, 4 * hidden_dim), jnp.float32),
        "W_hh": s * jax.random.normal(ks[2], (hidden_dim, 4 * hidden_dim), jnp.float32),
        "b":    s * jax.random.normal(ks[3], (1, 4 * hidden_dim), jnp.float32),
        "W_fc": s * jax.random.normal(ks[4], (hidden_dim, vocab_size), jnp.float32),
        "b_fc": s * jax.random.normal(ks[5], (1, vocab_size), jnp.float32),
    }


if __name__ == "__main__":
    # Small shapes consistent with the module (vocab, embed, hidden scaled down).
    VOCAB, EMB, HID = 256, 128, 128
    B, T = 8, 10

    key = jax.random.PRNGKey(0)
    kp, kx = jax.random.split(key)
    params = make_params(kp, VOCAB, EMB, HID)

    x_tokens = jax.random.randint(kx, (B, T), 0, VOCAB, dtype=jnp.int32)
    # padded batch: max(lengths) == T, some shorter sequences
    lengths = jnp.array([10, 7, 10, 5, 9, 10, 3, 8], dtype=jnp.int32)

    probs = lstm_policy_forward(x_tokens, lengths, params)
    probs = jax.block_until_ready(probs)

    ref = jax.block_until_ready(lstm_policy_ref(x_tokens, lengths, params))
    assert probs.shape == (B, VOCAB)
    assert jnp.allclose(jnp.sum(probs, axis=-1), 1.0, atol=1e-5)
    # bf16 matmul operands (f32 accumulation / state / softmax) => loosen the
    # pure-f32 reference tolerance slightly.
    assert jnp.allclose(probs, ref, atol=1e-4, rtol=1e-3)

    print("KERNEL_OK")
</pallas_src>

<mosaic_0001>
module attributes {stable_mosaic.version = 11 : i64} {
  func.func @_lstm_policy_kernel(%arg0: memref<1xi32, #tpu.memory_space<smem>>, %arg1: memref<80x128xbf16, #tpu.memory_space<vmem>>, %arg2: memref<8x1xf32, #tpu.memory_space<vmem>>, %arg3: memref<128x512xbf16, #tpu.memory_space<vmem>>, %arg4: memref<128x512xbf16, #tpu.memory_space<vmem>>, %arg5: memref<1x512xf32, #tpu.memory_space<vmem>>, %arg6: memref<128x256xbf16, #tpu.memory_space<vmem>>, %arg7: memref<1x256xf32, #tpu.memory_space<vmem>>, %arg8: memref<8x256xf32, #tpu.memory_space<vmem>>, %arg9: memref<80x512xf32, #tpu.memory_space<vmem>>) attributes {dimension_semantics = [], scalar_prefetch = 0 : i64, scratch_operands = 1 : i64, tpu.core_type = #tpu.core_type<tc>} {
    %c0 = arith.constant 0 : index
    %c0_0 = arith.constant 0 : index
    %0 = vector.load %arg1[%c0, %c0_0] : memref<80x128xbf16, #tpu.memory_space<vmem>>, vector<80x128xbf16>
    %c0_1 = arith.constant 0 : index
    %c0_2 = arith.constant 0 : index
    %1 = vector.load %arg3[%c0_1, %c0_2] : memref<128x512xbf16, #tpu.memory_space<vmem>>, vector<128x512xbf16>
    %cst = arith.constant dense<0.000000e+00> : vector<80x512xf32>
    %2 = tpu.matmul %0, %1, %cst {dimension_numbers = #tpu.dot_dimension_numbers<[1], [0], [0], [1], [0, 0, 1, 1], [], []>} : vector<80x128xbf16>, vector<128x512xbf16>, vector<80x512xf32> -> vector<80x512xf32>
    %c0_3 = arith.constant 0 : index
    %c0_4 = arith.constant 0 : index
    %3 = vector.load %arg5[%c0_3, %c0_4] : memref<1x512xf32, #tpu.memory_space<vmem>>, vector<1x512xf32>
    %4 = vector.broadcast %3 : vector<1x512xf32> to vector<80x512xf32>
    %5 = arith.addf %2, %4 : vector<80x512xf32>
    %c0_5 = arith.constant 0 : index
    %c0_6 = arith.constant 0 : index
    %6 = vector.load %arg9[%c0_5, %c0_6] : memref<80x512xf32, #tpu.memory_space<vmem>>, vector<80x512xf32>
    tpu.vector_store %arg9[%c0_5, %c0_6], %5 {strides = array<i32>} : memref<80x512xf32, #tpu.memory_space<vmem>>, vector<80x512xf32>,
    %c0_7 = arith.constant 0 : index
    %7 = memref.load %arg0[%c0_7] : memref<1xi32, #tpu.memory_space<smem>>
    %c1_i32 = arith.constant 1 : i32
    %8 = arith.addi %7, %c1_i32 : i32
    %cst_8 = arith.constant 0.000000e+00 : f32
    %9 = vector.broadcast %cst_8 : f32 to vector<8x128xf32>
    %cst_9 = arith.constant 0.000000e+00 : f32
    %10 = vector.broadcast %cst_9 : f32 to vector<8x128xf32>
    %c0_i32 = arith.constant 0 : i32
    %11 = arith.subi %8, %c0_i32 : i32
    %12 = arith.addi %c0_i32, %11 : i32
    %c1_i32_10 = arith.constant 1 : i32
    %13:2 = scf.for %arg10 = %c0_i32 to %12 step %c1_i32_10 iter_args(%arg11 = %9, %arg12 = %10) -> (vector<8x128xf32>, vector<8x128xf32>)  : i32 {
      %c8_i32 = arith.constant 8 : i32
      %38 = arith.muli %arg10, %c8_i32 : i32
      %39 = tpu.assume_multiple %38, 8 : i32
      %40 = arith.index_cast %39 : i32 to index
      %c0_23 = arith.constant 0 : index
      %41 = vector.load %arg9[%40, %c0_23] : memref<80x512xf32, #tpu.memory_space<vmem>>, vector<8x512xf32>
      %42 = arith.truncf %arg11 : vector<8x128xf32> to vector<8x128xbf16>
      %c0_24 = arith.constant 0 : index
      %c0_25 = arith.constant 0 : index
      %43 = vector.load %arg4[%c0_24, %c0_25] : memref<128x512xbf16, #tpu.memory_space<vmem>>, vector<128x512xbf16>
      %cst_26 = arith.constant dense<0.000000e+00> : vector<8x512xf32>
      %44 = tpu.matmul %42, %43, %cst_26 {dimension_numbers = #tpu.dot_dimension_numbers<[1], [0], [0], [1], [0, 0, 1, 1], [], []>} : vector<8x128xbf16>, vector<128x512xbf16>, vector<8x512xf32> -> vector<8x512xf32>
      %45 = arith.addf %41, %44 : vector<8x512xf32>
      %46 = vector.extract_strided_slice %45 {offsets = [0, 0], sizes = [8, 128], strides = [1, 1]} : vector<8x512xf32> to vector<8x128xf32>
      %cst_27 = arith.constant 5.000000e-01 : f32
      %47 = vector.broadcast %cst_27 : f32 to vector<8x128xf32>
      %48 = arith.mulf %47, %46 : vector<8x128xf32>
      %49 = math.tanh %48 : vector<8x128xf32>
      %cst_28 = arith.constant 5.000000e-01 : f32
      %50 = vector.broadcast %cst_28 : f32 to vector<8x128xf32>
      %51 = arith.mulf %50, %49 : vector<8x128xf32>
      %cst_29 = arith.constant 5.000000e-01 : f32
      %52 = vector.broadcast %cst_29 : f32 to vector<8x128xf32>
      %53 = arith.addf %51, %52 : vector<8x128xf32>
      %54 = vector.extract_strided_slice %45 {offsets = [0, 128], sizes = [8, 128], strides = [1, 1]} : vector<8x512xf32> to vector<8x128xf32>
      %cst_30 = arith.constant 5.000000e-01 : f32
      %55 = vector.broadcast %cst_30 : f32 to vector<8x128xf32>
      %56 = arith.mulf %55, %54 : vector<8x128xf32>
      %57 = math.tanh %56 : vector<8x128xf32>
      %cst_31 = arith.constant 5.000000e-01 : f32
      %58 = vector.broadcast %cst_31 : f32 to vector<8x128xf32>
      %59 = arith.mulf %58, %57 : vector<8x128xf32>
      %cst_32 = arith.constant 5.000000e-01 : f32
      %60 = vector.broadcast %cst_32 : f32 to vector<8x128xf32>
      %61 = arith.addf %59, %60 : vector<8x128xf32>
      %62 = vector.extract_strided_slice %45 {offsets = [0, 256], sizes = [8, 128], strides = [1, 1]} : vector<8x512xf32> to vector<8x128xf32>
      %63 = math.tanh %62 : vector<8x128xf32>
      %64 = vector.extract_strided_slice %45 {offsets = [0, 384], sizes = [8, 128], strides = [1, 1]} : vector<8x512xf32> to vector<8x128xf32>
      %cst_33 = arith.constant 5.000000e-01 : f32
      %65 = vector.broadcast %cst_33 : f32 to vector<8x128xf32>
      %66 = arith.mulf %65, %64 : vector<8x128xf32>
      %67 = math.tanh %66 : vector<8x128xf32>
      %cst_34 = arith.constant 5.000000e-01 : f32
      %68 = vector.broadcast %cst_34 : f32 to vector<8x128xf32>
      %69 = arith.mulf %68, %67 : vector<8x128xf32>
      %cst_35 = arith.constant 5.000000e-01 : f32
      %70 = vector.broadcast %cst_35 : f32 to vector<8x128xf32>
      %71 = arith.addf %69, %70 : vector<8x128xf32>
      %72 = arith.mulf %61, %arg12 : vector<8x128xf32>
      %73 = arith.mulf %53, %63 : vector<8x128xf32>
      %74 = arith.addf %72, %73 : vector<8x128xf32>
      %75 = math.tanh %74 : vector<8x128xf32>
      %76 = arith.mulf %71, %75 : vector<8x128xf32>
      scf.yield %76, %74 : vector<8x128xf32>, vector<8x128xf32>
    }
    %c0_11 = arith.constant 0 : index
    %c0_12 = arith.constant 0 : index
    %14 = vector.load %arg2[%c0_11, %c0_12] : memref<8x1xf32, #tpu.memory_space<vmem>>, vector<8x1xf32>
    %15 = vector.broadcast %14 : vector<8x1xf32> to vector<8x128xf32>
    %16 = arith.mulf %13#0, %15 : vector<8x128xf32>
    %17 = arith.truncf %16 : vector<8x128xf32> to vector<8x128xbf16>
    %c0_13 = arith.constant 0 : index
    %c0_14 = arith.constant 0 : index
    %18 = vector.load %arg6[%c0_13, %c0_14] : memref<128x256xbf16, #tpu.memory_space<vmem>>, vector<128x256xbf16>
    %cst_15 = arith.constant dense<0.000000e+00> : vector<8x256xf32>
    %19 = tpu.matmul %17, %18, %cst_15 {dimension_numbers = #tpu.dot_dimension_numbers<[1], [0], [0], [1], [0, 0, 1, 1], [], []>} : vector<8x128xbf16>, vector<128x256xbf16>, vector<8x256xf32> -> vector<8x256xf32>
    %c0_16 = arith.constant 0 : index
    %c0_17 = arith.constant 0 : index
    %20 = vector.load %arg7[%c0_16, %c0_17] : memref<1x256xf32, #tpu.memory_space<vmem>>, vector<1x256xf32>
    %21 = vector.broadcast %20 : vector<1x256xf32> to vector<8x256xf32>
    %22 = arith.addf %19, %21 : vector<8x256xf32>
    %cst_18 = arith.constant dense<0xFF800000> : vector<8xf32>
    %23 = vector.multi_reduction <maximumf>, %22, %cst_18 [1] : vector<8x256xf32> to vector<8xf32>
    %24 = vector.shape_cast %23 : vector<8xf32> to vector<8x1xf32>
    %25 = vector.broadcast %24 : vector<8x1xf32> to vector<8x256xf32>
    %26 = arith.subf %22, %25 : vector<8x256xf32>
    %27 = math.exp %26 : vector<8x256xf32>
    %cst_19 = arith.constant dense<0.000000e+00> : vector<8xf32>
    %28 = vector.multi_reduction <add>, %27, %cst_19 [1] : vector<8x256xf32> to vector<8xf32>
    %29 = vector.shape_cast %28 : vector<8xf32> to vector<8x1xf32>
    %30 = tpu.reciprocal %29 {approx = true} : vector<8x1xf32> -> vector<8x1xf32>
    %31 = arith.mulf %29, %30 : vector<8x1xf32>
    %cst_20 = arith.constant 2.000000e+00 : f32
    %32 = vector.broadcast %cst_20 : f32 to vector<8x1xf32>
    %33 = arith.subf %32, %31 : vector<8x1xf32>
    %34 = arith.mulf %30, %33 : vector<8x1xf32>
    %35 = vector.broadcast %34 : vector<8x1xf32> to vector<8x256xf32>
    %36 = arith.mulf %27, %35 : vector<8x256xf32>
    %c0_21 = arith.constant 0 : index
    %c0_22 = arith.constant 0 : index
    %37 = vector.load %arg8[%c0_21, %c0_22] : memref<8x256xf32, #tpu.memory_space<vmem>>, vector<8x256xf32>
    tpu.vector_store %arg8[%c0_21, %c0_22], %36 {strides = array<i32>} : memref<8x256xf32, #tpu.memory_space<vmem>>, vector<8x256xf32>,
    return
  }
}

</mosaic_0001>

<llo_original>
// kernel: tpu_custom_call.1
$region0: #{tpu_custom_call.1}
  #allocation0 [shape = 'u32[]', space=smem, size = 0x4, offset = 0x4, fixed_abs, tag = 'smem constant byte address 0x4 - core index']
  #allocation1 [shape = 'u32[144,128]{1,0:T(1,128)}', space=vmem, size = 0x12000, scoped, tag = 'internal scratch']
  #allocation2 [shape = 'f32[80,512]{1,0:T(8,128)}', space=vmem, size = 0x28000, scoped, tag = 'scratch operand']
  #allocation3 [shape = 's32[1]{0:T(128)S(6)}', space=smem, size = 0x200, scoped, tag = 'scoped memory for tpu_custom_call.1']
  %s0 = inlined_call_operand.<no memory space> [shape: s32[1], index: 0, kind: input, shape index: {}]
  %s1 = inlined_call_operand.hbm [shape: bf16[80,128], index: 1, kind: input, shape index: {}]
  %s2 = inlined_call_operand.vmem [shape: f32[8,1], index: 2, kind: input, shape index: {}]
  %s3 = inlined_call_operand.hbm [shape: bf16[128,512], index: 3, kind: input, shape index: {}]
  %s4 = inlined_call_operand.hbm [shape: bf16[128,512], index: 4, kind: input, shape index: {}]
  %s5 = inlined_call_operand.vmem [shape: f32[1,512], index: 5, kind: input, shape index: {}]
  %s6 = inlined_call_operand.hbm [shape: bf16[128,256], index: 6, kind: input, shape index: {}]
  %s7 = inlined_call_operand.vmem [shape: f32[1,256], index: 7, kind: input, shape index: {}]
  %s8 = inlined_call_operand.hbm [shape: f32[8,256], index: 8, kind: output, shape index: {}]
  %s9 = sld [smem:[#allocation0]]
  $region65: #{tpu_custom_call.1} parent=0
    _
  %s11 = ssub.s32 1, %s9
  %s12 = scalar_select 0, %s11, %s9
  %13 = sst [smem:[#allocation3]] %s0
  $region1: #{tpu_custom_call.1} parent=0
    #allocation4 [shape = 'u8[20480]{0}', space=vmem, size = 0x5000, scoped, tag = 'input window, operand 1, single buffered']
    #allocation5 [shape = 's32[1]{0}', space=sflag, size = 0x4, scoped, tag = 'scoped memory for tpu_custom_call.1']
    #allocation6 [shape = 's32[1]{0}', space=sflag, size = 0x4, scoped, tag = 'scoped memory for tpu_custom_call.1']
    #allocation7 [shape = 'u8[131072]{0}', space=vmem, size = 0x20000, scoped, tag = 'input window, operand 3, single buffered']
    #allocation8 [shape = 's32[1]{0}', space=sflag, size = 0x4, scoped, tag = 'scoped memory for tpu_custom_call.1']
    #allocation9 [shape = 'u8[131072]{0}', space=vmem, size = 0x20000, scoped, tag = 'input window, operand 4, single buffered']
    #allocation10 [shape = 'u8[65536]{0}', space=vmem, size = 0x10000, scoped, tag = 'input window, operand 6, single buffered']
    #allocation11 [shape = 's32[1]{0}', space=sflag, size = 0x4, scoped, tag = 'scoped memory for tpu_custom_call.1']
    #allocation12 [shape = 'u8[8192]{0}', space=vmem, size = 0x2000, scoped, tag = 'output window, operand 0, single buffered']
    %14 = vsyncpa [#allocation5], 0
    %15 = vsyncpa [#allocation8], 0
    %16 = vsyncpa [#allocation11], 0
    %17 = vsyncpa [#allocation6], 0
    // Predicated region
    $region2: #{tpu_custom_call.1} parent=1 // pred_check
      _
    $region3: #{tpu_custom_call.1} parent=1 // pred_check_branch
      %19 = sbr.rel (0) target = $region5
    $region4: #{tpu_custom_call.1} parent=1 // pred_region
      _
    $region5: #{tpu_custom_call.1} parent=1 // pred_fallthru
      _
    // Predicated region
    $region6: #{tpu_custom_call.1} parent=1 // pred_check
      _
    $region7: #{tpu_custom_call.1} parent=1 // pred_check_branch
      %21 = sbr.rel (0) target = $region9
    $region8: #{tpu_custom_call.1} parent=1 // pred_region
      %s23 = ssub.s32 640, 640
      %24 = vsyncadd [#allocation5], %s23
      %s25 = sshll.u32 [#allocation4], 4
      %s26 = int_to_ptr.vmem [resolvable:$true] %s25
      %31 = dma.hbm_to_vmem [thread:$0]  %s1, 640, %s26, [#allocation5], 64, 64, 4
    $region9: #{tpu_custom_call.1} parent=1 // pred_fallthru
      _
    // Predicated region
    $region10: #{tpu_custom_call.1} parent=1 // pred_check
      _
    $region11: #{tpu_custom_call.1} parent=1 // pred_check_branch
      %33 = sbr.rel (0) target = $region13
    $region12: #{tpu_custom_call.1} parent=1 // pred_region
      _
    $region13: #{tpu_custom_call.1} parent=1 // pred_fallthru
      _
    // Predicated region
    $region14: #{tpu_custom_call.1} parent=1 // pred_check
      _
    $region15: #{tpu_custom_call.1} parent=1 // pred_check_branch
      %35 = sbr.rel (0) target = $region17
    $region16: #{tpu_custom_call.1} parent=1 // pred_region
      %s37 = ssub.s32 4096, 4096
      %38 = vsyncadd [#allocation8], %s37
      %s39 = sshll.u32 [#allocation7], 4
      %s40 = int_to_ptr.vmem [resolvable:$true] %s39
      %45 = dma.hbm_to_vmem [thread:$0]  %s3, 4096, %s40, [#allocation8], 256, 256, 16
    $region17: #{tpu_custom_call.1} parent=1 // pred_fallthru
      _
    // Predicated region
    $region18: #{tpu_custom_call.1} parent=1 // pred_check
      _
    $region19: #{tpu_custom_call.1} parent=1 // pred_check_branch
      %47 = sbr.rel (0) target = $region21
    $region20: #{tpu_custom_call.1} parent=1 // pred_region
      %s49 = ssub.s32 4096, 4096
      %50 = vsyncadd [#allocation8], %s49
      %s51 = sshll.u32 [#allocation9], 4
      %s52 = int_to_ptr.vmem [resolvable:$true] %s51
      %57 = dma.hbm_to_vmem [thread:$0]  %s4, 4096, %s52, [#allocation8], 256, 256, 16
    $region21: #{tpu_custom_call.1} parent=1 // pred_fallthru
      _
    // Predicated region
    $region22: #{tpu_custom_call.1} parent=1 // pred_check
      _
    $region23: #{tpu_custom_call.1} parent=1 // pred_check_branch
      %59 = sbr.rel (0) target = $region25
    $region24: #{tpu_custom_call.1} parent=1 // pred_region
      _
    $region25: #{tpu_custom_call.1} parent=1 // pred_fallthru
      _
    // Predicated region
    $region26: #{tpu_custom_call.1} parent=1 // pred_check
      _
    $region27: #{tpu_custom_call.1} parent=1 // pred_check_branch
      %61 = sbr.rel (0) target = $region29
    $region28: #{tpu_custom_call.1} parent=1 // pred_region
      %s63 = ssub.s32 2048, 2048
      %64 = vsyncadd [#allocation11], %s63
      %s65 = sshll.u32 [#allocation10], 4
      %s66 = int_to_ptr.vmem [resolvable:$true] %s65
      %71 = dma.hbm_to_vmem [thread:$0]  %s6, 2048, %s66, [#allocation11], 128, 128, 8
    $region29: #{tpu_custom_call.1} parent=1 // pred_fallthru
      _
    // Predicated region
    $region30: #{tpu_custom_call.1} parent=1 // pred_check
      _
    $region31: #{tpu_custom_call.1} parent=1 // pred_check_branch
      %73 = sbr.rel (0) target = $region33
    $region32: #{tpu_custom_call.1} parent=1 // pred_region
      _
    $region33: #{tpu_custom_call.1} parent=1 // pred_fallthru
      _
    // Predicated region
    $region34: #{tpu_custom_call.1} parent=1 // pred_check
      _
    $region35: #{tpu_custom_call.1} parent=1 // pred_check_branch
      %75 = sbr.rel (0) target = $region37
    $region36: #{tpu_custom_call.1} parent=1 // pred_region
      %76 = dma.done [#allocation5], 640
    $region37: #{tpu_custom_call.1} parent=1 // pred_fallthru
      _
    // Predicated region
    $region38: #{tpu_custom_call.1} parent=1 // pred_check
      _
    $region39: #{tpu_custom_call.1} parent=1 // pred_check_branch
      %78 = sbr.rel (0) target = $region41
    $region40: #{tpu_custom_call.1} parent=1 // pred_region
      %79 = dma.done [#allocation8], 4096
    $region41: #{tpu_custom_call.1} parent=1 // pred_fallthru
      _
    // Predicated region
    $region42: #{tpu_custom_call.1} parent=1 // pred_check
      _
    $region43: #{tpu_custom_call.1} parent=1 // pred_check_branch
      %81 = sbr.rel (0) target = $region45
    $region44: #{tpu_custom_call.1} parent=1 // pred_region
      %82 = dma.done [#allocation8], 4096
    $region45: #{tpu_custom_call.1} parent=1 // pred_fallthru
      _
    // Predicated region
    $region46: #{tpu_custom_call.1} parent=1 // pred_check
      _
    $region47: #{tpu_custom_call.1} parent=1 // pred_check_branch
      %84 = sbr.rel (0) target = $region49
    $region48: #{tpu_custom_call.1} parent=1 // pred_region
      %85 = dma.done [#allocation11], 2048
    $region49: #{tpu_custom_call.1} parent=1 // pred_fallthru
      _
    %v87 = vld [vmem:[#allocation4] sm:$0xf]
    %v88 = vld [vmem:[#allocation4 + $0x4] sm:$0xf]
    %v89 = vld [vmem:[#allocation4 + $0x8] sm:$0xf]
    %v90 = vld [vmem:[#allocation4 + $0xc] sm:$0xf]
    %v91 = vld [vmem:[#allocation4 + $0x10] sm:$0xf]
    %v92 = vld [vmem:[#allocation4 + $0x14] sm:$0xf]
    %v93 = vld [vmem:[#allocation4 + $0x18] sm:$0xf]
    %v94 = vld [vmem:[#allocation4 + $0x1c] sm:$0xf]
    %v95 = vld [vmem:[#allocation4 + $0x20] sm:$0xf]
    %v96 = vld [vmem:[#allocation4 + $0x24] sm:$0xf]
    %v97 = vld [vmem:[#allocation7] sm:$0xff]
    %v98 = vld [vmem:[#allocation7 + $0x8] sm:$0xff]
    %v99 = vld [vmem:[#allocation7 + $0x10] sm:$0xff]
    %v100 = vld [vmem:[#allocation7 + $0x18] sm:$0xff]
    %v101 = vld [vmem:[#allocation7 + $0x20] sm:$0xff]
    %v102 = vld [vmem:[#allocation7 + $0x28] sm:$0xff]
    %v103 = vld [vmem:[#allocation7 + $0x30] sm:$0xff]
    %v104 = vld [vmem:[#allocation7 + $0x38] sm:$0xff]
    %v105 = vld [vmem:[#allocation7 + $0x40] sm:$0xff]
    %v106 = vld [vmem:[#allocation7 + $0x48] sm:$0xff]
    %v107 = vld [vmem:[#allocation7 + $0x50] sm:$0xff]
    %v108 = vld [vmem:[#allocation7 + $0x58] sm:$0xff]
    %v109 = vld [vmem:[#allocation7 + $0x60] sm:$0xff]
    %v110 = vld [vmem:[#allocation7 + $0x68] sm:$0xff]
    %v111 = vld [vmem:[#allocation7 + $0x70] sm:$0xff]
    %v112 = vld [vmem:[#allocation7 + $0x78] sm:$0xff]
    %v113 = vld [vmem:[#allocation7 + $0x80] sm:$0xff]
    %v114 = vld [vmem:[#allocation7 + $0x88] sm:$0xff]
    %v115 = vld [vmem:[#allocation7 + $0x90] sm:$0xff]
    %v116 = vld [vmem:[#allocation7 + $0x98] sm:$0xff]
    %v117 = vld [vmem:[#allocation7 + $0xa0] sm:$0xff]
    %v118 = vld [vmem:[#allocation7 + $0xa8] sm:$0xff]
    %v119 = vld [vmem:[#allocation7 + $0xb0] sm:$0xff]
    %v120 = vld [vmem:[#allocation7 + $0xb8] sm:$0xff]
    %v121 = vld [vmem:[#allocation7 + $0xc0] sm:$0xff]
    %v122 = vld [vmem:[#allocation7 + $0xc8] sm:$0xff]
    %v123 = vld [vmem:[#allocation7 + $0xd0] sm:$0xff]
    %v124 = vld [vmem:[#allocation7 + $0xd8] sm:$0xff]
    %v125 = vld [vmem:[#allocation7 + $0xe0] sm:$0xff]
    %v126 = vld [vmem:[#allocation7 + $0xe8] sm:$0xff]
    %v127 = vld [vmem:[#allocation7 + $0xf0] sm:$0xff]
    %v128 = vld [vmem:[#allocation7 + $0xf8] sm:$0xff]
    %v129 = vld [vmem:[%s5] sm:$0xf]
    %v131 = vlaneseq
    %v132 = vshrl.u32 %v131, 7
    %v133 = vsub.s32 0, %v132
    %v134 = vrot.slane %v129, %v133
    %v135 = vlaneseq
    %v136 = vshrl.u32 %v135, 7
    %v137 = vsub.s32 1, %v136
    %v138 = vrot.slane %v129, %v137
    %v139 = vlaneseq
    %v140 = vshrl.u32 %v139, 7
    %v141 = vsub.s32 2, %v140
    %v142 = vrot.slane %v129, %v141
    %v143 = vlaneseq
    %v144 = vshrl.u32 %v143, 7
    %v145 = vsub.s32 3, %v144
    %v146 = vrot.slane %v129, %v145
    %v161 = vunpack.c.l.b16 %v87
    %v162 = vunpack.c.l.b16 %v88
    %v163 = vunpack.c.l.b16 %v89
    %v164 = vunpack.c.l.b16 %v90
    %v165 = vunpack.c.l.b16 %v91
    %v166 = vunpack.c.l.b16 %v92
    %v167 = vunpack.c.l.b16 %v93
    %v168 = vunpack.c.l.b16 %v94
    %v169 = vunpack.c.l.b16 %v95
    %v170 = vunpack.c.l.b16 %v96
    %v171 = vpack.c.b16 %v162, %v161
    %v172 = vpack.c.b16 %v164, %v163
    %v173 = vpack.c.b16 %v166, %v165
    %v174 = vpack.c.b16 %v168, %v167
    %v175 = vpack.c.b16 %v170, %v169
    %v213 = vunpack.c.l.b16 %v97
    %v214 = vunpack.c.h.b16 %v97
    %v215 = vunpack.c.l.b16 %v98
    %v216 = vunpack.c.h.b16 %v98
    %v217 = vunpack.c.l.b16 %v99
    %v218 = vunpack.c.h.b16 %v99
    %v219 = vunpack.c.l.b16 %v100
    %v220 = vunpack.c.h.b16 %v100
    %v221 = vunpack.c.l.b16 %v101
    %v222 = vunpack.c.h.b16 %v101
    %v223 = vunpack.c.l.b16 %v102
    %v224 = vunpack.c.h.b16 %v102
    %v225 = vunpack.c.l.b16 %v103
    %v226 = vunpack.c.h.b16 %v103
    %v227 = vunpack.c.l.b16 %v104
    %v228 = vunpack.c.h.b16 %v104
    %v229 = vunpack.c.l.b16 %v105
    %v230 = vunpack.c.h.b16 %v105
    %v231 = vunpack.c.l.b16 %v106
    %v232 = vunpack.c.h.b16 %v106
    %v233 = vunpack.c.l.b16 %v107
    %v234 = vunpack.c.h.b16 %v107
    %v235 = vunpack.c.l.b16 %v108
    %v236 = vunpack.c.h.b16 %v108
    %v237 = vunpack.c.l.b16 %v109
    %v238 = vunpack.c.h.b16 %v109
    %v239 = vunpack.c.l.b16 %v110
    %v240 = vunpack.c.h.b16 %v110
    %v241 = vunpack.c.l.b16 %v111
    %v242 = vunpack.c.h.b16 %v111
    %v243 = vunpack.c.l.b16 %v112
    %v244 = vunpack.c.h.b16 %v112
    %v245 = vunpack.c.l.b16 %v113
    %v246 = vunpack.c.h.b16 %v113
    %v247 = vunpack.c.l.b16 %v114
    %v248 = vunpack.c.h.b16 %v114
    %v249 = vunpack.c.l.b16 %v115
    %v250 = vunpack.c.h.b16 %v115
    %v251 = vunpack.c.l.b16 %v116
    %v252 = vunpack.c.h.b16 %v116
    %v253 = vunpack.c.l.b16 %v117
    %v254 = vunpack.c.h.b16 %v117
    %v255 = vunpack.c.l.b16 %v118
    %v256 = vunpack.c.h.b16 %v118
    %v257 = vunpack.c.l.b16 %v119
    %v258 = vunpack.c.h.b16 %v119
    %v259 = vunpack.c.l.b16 %v120
    %v260 = vunpack.c.h.b16 %v120
    %v261 = vunpack.c.l.b16 %v121
    %v262 = vunpack.c.h.b16 %v121
    %v263 = vunpack.c.l.b16 %v122
    %v264 = vunpack.c.h.b16 %v122
    %v265 = vunpack.c.l.b16 %v123
    %v266 = vunpack.c.h.b16 %v123
    %v267 = vunpack.c.l.b16 %v124
    %v268 = vunpack.c.h.b16 %v124
    %v269 = vunpack.c.l.b16 %v125
    %v270 = vunpack.c.h.b16 %v125
    %v271 = vunpack.c.l.b16 %v126
    %v272 = vunpack.c.h.b16 %v126
    %v273 = vunpack.c.l.b16 %v127
    %v274 = vunpack.c.h.b16 %v127
    %v275 = vunpack.c.l.b16 %v128
    %v276 = vunpack.c.h.b16 %v128
    %v277 = vpack.c.b16 %v217, %v213
    %v278 = vpack.c.b16 %v218, %v214
    %v279 = vpack.c.b16 %v219, %v215
    %v280 = vpack.c.b16 %v220, %v216
    %v281 = vpack.c.b16 %v225, %v221
    %v282 = vpack.c.b16 %v226, %v222
    %v283 = vpack.c.b16 %v227, %v223
    %v284 = vpack.c.b16 %v228, %v224
    %v285 = vpack.c.b16 %v233, %v229
    %v286 = vpack.c.b16 %v234, %v230
    %v287 = vpack.c.b16 %v235, %v231
    %v288 = vpack.c.b16 %v236, %v232
    %v289 = vpack.c.b16 %v241, %v237
    %v290 = vpack.c.b16 %v242, %v238
    %v291 = vpack.c.b16 %v243, %v239
    %v292 = vpack.c.b16 %v244, %v240
    %v293 = vpack.c.b16 %v249, %v245
    %v294 = vpack.c.b16 %v250, %v246
    %v295 = vpack.c.b16 %v251, %v247
    %v296 = vpack.c.b16 %v252, %v248
    %v297 = vpack.c.b16 %v257, %v253
    %v298 = vpack.c.b16 %v258, %v254
    %v299 = vpack.c.b16 %v259, %v255
    %v300 = vpack.c.b16 %v260, %v256
    %v301 = vpack.c.b16 %v265, %v261
    %v302 = vpack.c.b16 %v266, %v262
    %v303 = vpack.c.b16 %v267, %v263
    %v304 = vpack.c.b16 %v268, %v264
    %v305 = vpack.c.b16 %v273, %v269
    %v306 = vpack.c.b16 %v274, %v270
    %v307 = vpack.c.b16 %v275, %v271
    %v308 = vpack.c.b16 %v276, %v272
    %341 = vmatprep.subr.bf16.mxu0 %v278
    %342 = vmatpush1.bf16.msra.mxu0 %v277
    %343 = vmatprep.subr.bf16.mxu0 %v282
    %344 = vmatpush1.bf16.msra.mxu0 %v281
    %345 = vmatprep.subr.bf16.mxu0 %v286
    %346 = vmatpush1.bf16.msra.mxu0 %v285
    %347 = vmatprep.subr.bf16.mxu0 %v290
    %348 = vmatpush1.bf16.msra.mxu0 %v289
    %349 = vmatprep.subr.bf16.mxu0 %v294
    %350 = vmatpush1.bf16.msra.mxu0 %v293
    %351 = vmatprep.subr.bf16.mxu0 %v298
    %352 = vmatpush1.bf16.msra.mxu0 %v297
    %353 = vmatprep.subr.bf16.mxu0 %v302
    %354 = vmatpush1.bf16.msra.mxu0 %v301
    %355 = vmatprep.subr.bf16.mxu0 %v306
    %356 = vmatpush1.bf16.msra.mxu0 %v305
    %357 = vmatprep.subr.bf16.mxu0 0
    %358 = vmatpush1.bf16.msra.mxu0 0
    %359 = vmatprep.subr.bf16.mxu0 0
    %360 = vmatpush1.bf16.msra.mxu0 0
    %361 = vmatprep.subr.bf16.mxu0 0
    %362 = vmatpush1.bf16.msra.mxu0 0
    %363 = vmatprep.subr.bf16.mxu0 0
    %364 = vmatpush1.bf16.msra.mxu0 0
    %365 = vmatprep.subr.bf16.mxu0 0
    %366 = vmatpush1.bf16.msra.mxu0 0
    %367 = vmatprep.subr.bf16.mxu0 0
    %368 = vmatpush1.bf16.msra.mxu0 0
    %369 = vmatprep.subr.bf16.mxu0 0
    %370 = vmatpush1.bf16.msra.mxu0 0
    %371 = vmatprep.subr.bf16.mxu0 0
    %372 = vmatpush1.bf16.msra.mxu0 0
    %373 = vmatprep.mubr.bf16.mxu0 0
    %374 = vmatmul.mubr.bf16.gmra.mrb[0].mxu0 %v171
    %v375 = vpop.f32.mrb[0].mxu0
    %v376 = vadd.f32 %v134, %v375
    %v377 = vpop.f32.mrb[0].mxu0
    %v378 = vadd.f32 %v138, %v377
    %v379 = vpop.f32.mrb[0].mxu0
    %v380 = vadd.f32 %v134, %v379
    %v381 = vpop.f32.mrb[0].mxu0
    %v382 = vadd.f32 %v138, %v381
    %383 = vmatprep.mubr.bf16.mxu0 0
    %384 = vmatmul.mubr.bf16.gmra.mrb[0].mxu0 %v172
    %v385 = vpop.f32.mrb[0].mxu0
    %v386 = vadd.f32 %v134, %v385
    %v387 = vpop.f32.mrb[0].mxu0
    %v388 = vadd.f32 %v138, %v387
    %v389 = vpop.f32.mrb[0].mxu0
    %v390 = vadd.f32 %v134, %v389
    %v391 = vpop.f32.mrb[0].mxu0
    %v392 = vadd.f32 %v138, %v391
    %393 = vmatprep.mubr.bf16.mxu0 0
    %394 = vmatmul.mubr.bf16.gmra.mrb[0].mxu0 %v173
    %v395 = vpop.f32.mrb[0].mxu0
    %v396 = vadd.f32 %v134, %v395
    %v397 = vpop.f32.mrb[0].mxu0
    %v398 = vadd.f32 %v138, %v397
    %v399 = vpop.f32.mrb[0].mxu0
    %v400 = vadd.f32 %v134, %v399
    %v401 = vpop.f32.mrb[0].mxu0
    %v402 = vadd.f32 %v138, %v401
    %403 = vmatprep.mubr.bf16.mxu0 0
    %404 = vmatmul.mubr.bf16.gmra.mrb[0].mxu0 %v174
    %v405 = vpop.f32.mrb[0].mxu0
    %v406 = vadd.f32 %v134, %v405
    %v407 = vpop.f32.mrb[0].mxu0
    %v408 = vadd.f32 %v138, %v407
    %v409 = vpop.f32.mrb[0].mxu0
    %v410 = vadd.f32 %v134, %v409
    %v411 = vpop.f32.mrb[0].mxu0
    %v412 = vadd.f32 %v138, %v411
    %413 = vmatprep.mubr.bf16.mxu0 0
    %414 = vmatmul.mubr.bf16.gmra.mrb[0].mxu0 %v175
    %v415 = vpop.f32.mrb[0].mxu0
    %v416 = vadd.f32 %v134, %v415
    %v417 = vpop.f32.mrb[0].mxu0
    %v418 = vadd.f32 %v138, %v417
    %v419 = vpop.f32.mrb[0].mxu0
    %v420 = vadd.f32 %v134, %v419
    %v421 = vpop.f32.mrb[0].mxu0
    %v422 = vadd.f32 %v138, %v421
    %423 = vdwg.mxu0
    %424 = vmatprep.subr.bf16.mxu0 %v280
    %425 = vmatpush1.bf16.msra.mxu0 %v279
    %426 = vmatprep.subr.bf16.mxu0 %v284
    %427 = vmatpush1.bf16.msra.mxu0 %v283
    %428 = vmatprep.subr.bf16.mxu0 %v288
    %429 = vmatpush1.bf16.msra.mxu0 %v287
    %430 = vmatprep.subr.bf16.mxu0 %v292
    %431 = vmatpush1.bf16.msra.mxu0 %v291
    %432 = vmatprep.subr.bf16.mxu0 %v296
    %433 = vmatpush1.bf16.msra.mxu0 %v295
    %434 = vmatprep.subr.bf16.mxu0 %v300
    %435 = vmatpush1.bf16.msra.mxu0 %v299
    %436 = vmatprep.subr.bf16.mxu0 %v304
    %437 = vmatpush1.bf16.msra.mxu0 %v303
    %438 = vmatprep.subr.bf16.mxu0 %v308
    %439 = vmatpush1.bf16.msra.mxu0 %v307
    %440 = vmatprep.subr.bf16.mxu0 0
    %441 = vmatpush1.bf16.msra.mxu0 0
    %442 = vmatprep.subr.bf16.mxu0 0
    %443 = vmatpush1.bf16.msra.mxu0 0
    %444 = vmatprep.subr.bf16.mxu0 0
    %445 = vmatpush1.bf16.msra.mxu0 0
    %446 = vmatprep.subr.bf16.mxu0 0
    %447 = vmatpush1.bf16.msra.mxu0 0
    %448 = vmatprep.subr.bf16.mxu0 0
    %449 = vmatpush1.bf16.msra.mxu0 0
    %450 = vmatprep.subr.bf16.mxu0 0
    %451 = vmatpush1.bf16.msra.mxu0 0
    %452 = vmatprep.subr.bf16.mxu0 0
    %453 = vmatpush1.bf16.msra.mxu0 0
    %454 = vmatprep.subr.bf16.mxu0 0
    %455 = vmatpush1.bf16.msra.mxu0 0
    %456 = vmatprep.mubr.bf16.mxu0 0
    %457 = vmatmul.mubr.bf16.gmra.mrb[0].mxu0 %v171
    %v458 = vpop.f32.mrb[0].mxu0
    %v459 = vadd.f32 %v142, %v458
    %v460 = vpop.f32.mrb[0].mxu0
    %v461 = vadd.f32 %v146, %v460
    %v462 = vpop.f32.mrb[0].mxu0
    %v463 = vadd.f32 %v142, %v462
    %v464 = vpop.f32.mrb[0].mxu0
    %v465 = vadd.f32 %v146, %v464
    %466 = vmatprep.mubr.bf16.mxu0 0
    %467 = vmatmul.mubr.bf16.gmra.mrb[0].mxu0 %v172
    %v468 = vpop.f32.mrb[0].mxu0
    %v469 = vadd.f32 %v142, %v468
    %v470 = vpop.f32.mrb[0].mxu0
    %v471 = vadd.f32 %v146, %v470
    %v472 = vpop.f32.mrb[0].mxu0
    %v473 = vadd.f32 %v142, %v472
    %v474 = vpop.f32.mrb[0].mxu0
    %v475 = vadd.f32 %v146, %v474
    %476 = vmatprep.mubr.bf16.mxu0 0
    %477 = vmatmul.mubr.bf16.gmra.mrb[0].mxu0 %v173
    %v478 = vpop.f32.mrb[0].mxu0
    %v479 = vadd.f32 %v142, %v478
    %v480 = vpop.f32.mrb[0].mxu0
    %v481 = vadd.f32 %v146, %v480
    %v482 = vpop.f32.mrb[0].mxu0
    %v483 = vadd.f32 %v142, %v482
    %v484 = vpop.f32.mrb[0].mxu0
    %v485 = vadd.f32 %v146, %v484
    %486 = vmatprep.mubr.bf16.mxu0 0
    %487 = vmatmul.mubr.bf16.gmra.mrb[0].mxu0 %v174
    %v488 = vpop.f32.mrb[0].mxu0
    %v489 = vadd.f32 %v142, %v488
    %v490 = vpop.f32.mrb[0].mxu0
    %v491 = vadd.f32 %v146, %v490
    %v492 = vpop.f32.mrb[0].mxu0
    %v493 = vadd.f32 %v142, %v492
    %v494 = vpop.f32.mrb[0].mxu0
    %v495 = vadd.f32 %v146, %v494
    %496 = vmatprep.mubr.bf16.mxu0 0
    %497 = vmatmul.mubr.bf16.gmra.mrb[0].mxu0 %v175
    %v498 = vpop.f32.mrb[0].mxu0
    %v499 = vadd.f32 %v142, %v498
    %v500 = vpop.f32.mrb[0].mxu0
    %v501 = vadd.f32 %v146, %v500
    %v502 = vpop.f32.mrb[0].mxu0
    %v503 = vadd.f32 %v142, %v502
    %v504 = vpop.f32.mrb[0].mxu0
    %v505 = vadd.f32 %v146, %v504
    %506 = vdwg.mxu0
    %507 = vst [vmem:[#allocation2] sm:$0xff] %v376
    %508 = vst [vmem:[#allocation2 + $0x8] sm:$0xff] %v378
    %509 = vst [vmem:[#allocation2 + $0x10] sm:$0xff] %v459
    %510 = vst [vmem:[#allocation2 + $0x18] sm:$0xff] %v461
    %511 = vst [vmem:[#allocation2 + $0x20] sm:$0xff] %v380
    %512 = vst [vmem:[#allocation2 + $0x28] sm:$0xff] %v382
    %513 = vst [vmem:[#allocation2 + $0x30] sm:$0xff] %v463
    %514 = vst [vmem:[#allocation2 + $0x38] sm:$0xff] %v465
    %515 = vst [vmem:[#allocation2 + $0x40] sm:$0xff] %v386
    %516 = vst [vmem:[#allocation2 + $0x48] sm:$0xff] %v388
    %517 = vst [vmem:[#allocation2 + $0x50] sm:$0xff] %v469
    %518 = vst [vmem:[#allocation2 + $0x58] sm:$0xff] %v471
    %519 = vst [vmem:[#allocation2 + $0x60] sm:$0xff] %v390
    %520 = vst [vmem:[#allocation2 + $0x68] sm:$0xff] %v392
    %521 = vst [vmem:[#allocation2 + $0x70] sm:$0xff] %v473
    %522 = vst [vmem:[#allocation2 + $0x78] sm:$0xff] %v475
    %523 = vst [vmem:[#allocation2 + $0x80] sm:$0xff] %v396
    %524 = vst [vmem:[#allocation2 + $0x88] sm:$0xff] %v398
    %525 = vst [vmem:[#allocation2 + $0x90] sm:$0xff] %v479
    %526 = vst [vmem:[#allocation2 + $0x98] sm:$0xff] %v481
    %527 = vst [vmem:[#allocation2 + $0xa0] sm:$0xff] %v400
    %528 = vst [vmem:[#allocation2 + $0xa8] sm:$0xff] %v402
    %529 = vst [vmem:[#allocation2 + $0xb0] sm:$0xff] %v483
    %530 = vst [vmem:[#allocation2 + $0xb8] sm:$0xff] %v485
    %531 = vst [vmem:[#allocation2 + $0xc0] sm:$0xff] %v406
    %532 = vst [vmem:[#allocation2 + $0xc8] sm:$0xff] %v408
    %533 = vst [vmem:[#allocation2 + $0xd0] sm:$0xff] %v489
    %534 = vst [vmem:[#allocation2 + $0xd8] sm:$0xff] %v491
    %535 = vst [vmem:[#allocation2 + $0xe0] sm:$0xff] %v410
    %536 = vst [vmem:[#allocation2 + $0xe8] sm:$0xff] %v412
    %537 = vst [vmem:[#allocation2 + $0xf0] sm:$0xff] %v493
    %538 = vst [vmem:[#allocation2 + $0xf8] sm:$0xff] %v495
    %539 = vst [vmem:[#allocation2 + $0x100] sm:$0xff] %v416
    %540 = vst [vmem:[#allocation2 + $0x108] sm:$0xff] %v418
    %541 = vst [vmem:[#allocation2 + $0x110] sm:$0xff] %v499
    %542 = vst [vmem:[#allocation2 + $0x118] sm:$0xff] %v501
    %543 = vst [vmem:[#allocation2 + $0x120] sm:$0xff] %v420
    %544 = vst [vmem:[#allocation2 + $0x128] sm:$0xff] %v422
    %545 = vst [vmem:[#allocation2 + $0x130] sm:$0xff] %v503
    %546 = vst [vmem:[#allocation2 + $0x138] sm:$0xff] %v505
    %s547 = sld [smem:[#allocation3]]
    %s548 = sadd.s32 %s547, 1
    // While loop
    $region50: #{tpu_custom_call.1} parent=1 // loop_pre_header
      _
    $region51: #{tpu_custom_call.1} parent=1 // loop_header
      %s550 = sphi 0, %s552
      %p551 = scmp.ge.s32.totalorder %s550, %s548
      %v555 = vphi 0.0, %v863
      %v556 = vphi 0.0, %v861
    $region52: #{tpu_custom_call.1} parent=1 // loop_header_branch
      %554 = sbr.rel (%p551) target = $region56
    $region53: #{tpu_custom_call.1} parent=1 // loop_body
      %s557 = smul.u32 %s550, 8
      %s558 = sshra.s32 %s557, 3
      %s559 = sand.u32 %s557, 7
      %s560 = smul.u32 %s558, 4
      %s561 = smul.addr %s560, 8
      %s562 = scalar_lea.vmem [#allocation2], %s561
      %v563 = vld [vmem:[%s562] sm:$0xff]
      %v564 = vld [vmem:[%s562 + $0x8] sm:$0xff]
      %v565 = vld [vmem:[%s562 + $0x10] sm:$0xff]
      %v566 = vld [vmem:[%s562 + $0x18] sm:$0xff]
      %v567 = vpack.c.bf16 %v555, %v555
      %v568 = vld [vmem:[#allocation9] sm:$0xff]
      %v569 = vld [vmem:[#allocation9 + $0x8] sm:$0xff]
      %v570 = vld [vmem:[#allocation9 + $0x10] sm:$0xff]
      %v571 = vld [vmem:[#allocation9 + $0x18] sm:$0xff]
      %v572 = vld [vmem:[#allocation9 + $0x20] sm:$0xff]
      %v573 = vld [vmem:[#allocation9 + $0x28] sm:$0xff]
      %v574 = vld [vmem:[#allocation9 + $0x30] sm:$0xff]
      %v575 = vld [vmem:[#allocation9 + $0x38] sm:$0xff]
      %v576 = vld [vmem:[#allocation9 + $0x40] sm:$0xff]
      %v577 = vld [vmem:[#allocation9 + $0x48] sm:$0xff]
      %v578 = vld [vmem:[#allocation9 + $0x50] sm:$0xff]
      %v579 = vld [vmem:[#allocation9 + $0x58] sm:$0xff]
      %v580 = vld [vmem:[#allocation9 + $0x60] sm:$0xff]
      %v581 = vld [vmem:[#allocation9 + $0x68] sm:$0xff]
      %v582 = vld [vmem:[#allocation9 + $0x70] sm:$0xff]
      %v583 = vld [vmem:[#allocation9 + $0x78] sm:$0xff]
      %v584 = vld [vmem:[#allocation9 + $0x80] sm:$0xff]
      %v585 = vld [vmem:[#allocation9 + $0x88] sm:$0xff]
      %v586 = vld [vmem:[#allocation9 + $0x90] sm:$0xff]
      %v587 = vld [vmem:[#allocation9 + $0x98] sm:$0xff]
      %v588 = vld [vmem:[#allocation9 + $0xa0] sm:$0xff]
      %v589 = vld [vmem:[#allocation9 + $0xa8] sm:$0xff]
      %v590 = vld [vmem:[#allocation9 + $0xb0] sm:$0xff]
      %v591 = vld [vmem:[#allocation9 + $0xb8] sm:$0xff]
      %v592 = vld [vmem:[#allocation9 + $0xc0] sm:$0xff]
      %v593 = vld [vmem:[#allocation9 + $0xc8] sm:$0xff]
      %v594 = vld [vmem:[#allocation9 + $0xd0] sm:$0xff]
      %v595 = vld [vmem:[#allocation9 + $0xd8] sm:$0xff]
      %v596 = vld [vmem:[#allocation9 + $0xe0] sm:$0xff]
      %v597 = vld [vmem:[#allocation9 + $0xe8] sm:$0xff]
      %v598 = vld [vmem:[#allocation9 + $0xf0] sm:$0xff]
      %v599 = vld [vmem:[#allocation9 + $0xf8] sm:$0xff]
      %v632 = vunpack.c.l.b16 %v568
      %v633 = vunpack.c.h.b16 %v568
      %v634 = vunpack.c.l.b16 %v569
      %v635 = vunpack.c.h.b16 %v569
      %v636 = vunpack.c.l.b16 %v570
      %v637 = vunpack.c.h.b16 %v570
      %v638 = vunpack.c.l.b16 %v571
      %v639 = vunpack.c.h.b16 %v571
      %v640 = vunpack.c.l.b16 %v572
      %v641 = vunpack.c.h.b16 %v572
      %v642 = vunpack.c.l.b16 %v573
      %v643 = vunpack.c.h.b16 %v573
      %v644 = vunpack.c.l.b16 %v574
      %v645 = vunpack.c.h.b16 %v574
      %v646 = vunpack.c.l.b16 %v575
      %v647 = vunpack.c.h.b16 %v575
      %v648 = vunpack.c.l.b16 %v576
      %v649 = vunpack.c.h.b16 %v576
      %v650 = vunpack.c.l.b16 %v577
      %v651 = vunpack.c.h.b16 %v577
      %v652 = vunpack.c.l.b16 %v578
      %v653 = vunpack.c.h.b16 %v578
      %v654 = vunpack.c.l.b16 %v579
      %v655 = vunpack.c.h.b16 %v579
      %v656 = vunpack.c.l.b16 %v580
      %v657 = vunpack.c.h.b16 %v580
      %v658 = vunpack.c.l.b16 %v581
      %v659 = vunpack.c.h.b16 %v581
      %v660 = vunpack.c.l.b16 %v582
      %v661 = vunpack.c.h.b16 %v582
      %v662 = vunpack.c.l.b16 %v583
      %v663 = vunpack.c.h.b16 %v583
      %v664 = vunpack.c.l.b16 %v584
      %v665 = vunpack.c.h.b16 %v584
      %v666 = vunpack.c.l.b16 %v585
      %v667 = vunpack.c.h.b16 %v585
      %v668 = vunpack.c.l.b16 %v586
      %v669 = vunpack.c.h.b16 %v586
      %v670 = vunpack.c.l.b16 %v587
      %v671 = vunpack.c.h.b16 %v587
      %v672 = vunpack.c.l.b16 %v588
      %v673 = vunpack.c.h.b16 %v588
      %v674 = vunpack.c.l.b16 %v589
      %v675 = vunpack.c.h.b16 %v589
      %v676 = vunpack.c.l.b16 %v590
      %v677 = vunpack.c.h.b16 %v590
      %v678 = vunpack.c.l.b16 %v591
      %v679 = vunpack.c.h.b16 %v591
      %v680 = vunpack.c.l.b16 %v592
      %v681 = vunpack.c.h.b16 %v592
      %v682 = vunpack.c.l.b16 %v593
      %v683 = vunpack.c.h.b16 %v593
      %v684 = vunpack.c.l.b16 %v594
      %v685 = vunpack.c.h.b16 %v594
      %v686 = vunpack.c.l.b16 %v595
      %v687 = vunpack.c.h.b16 %v595
      %v688 = vunpack.c.l.b16 %v596
      %v689 = vunpack.c.h.b16 %v596
      %v690 = vunpack.c.l.b16 %v597
      %v691 = vunpack.c.h.b16 %v597
      %v692 = vunpack.c.l.b16 %v598
      %v693 = vunpack.c.h.b16 %v598
      %v694 = vunpack.c.l.b16 %v599
      %v695 = vunpack.c.h.b16 %v599
      %v696 = vpack.c.b16 %v636, %v632
      %v697 = vpack.c.b16 %v637, %v633
      %v698 = vpack.c.b16 %v638, %v634
      %v699 = vpack.c.b16 %v639, %v635
      %v700 = vpack.c.b16 %v644, %v640
      %v701 = vpack.c.b16 %v645, %v641
      %v702 = vpack.c.b16 %v646, %v642
      %v703 = vpack.c.b16 %v647, %v643
      %v704 = vpack.c.b16 %v652, %v648
      %v705 = vpack.c.b16 %v653, %v649
      %v706 = vpack.c.b16 %v654, %v650
      %v707 = vpack.c.b16 %v655, %v651
      %v708 = vpack.c.b16 %v660, %v656
      %v709 = vpack.c.b16 %v661, %v657
      %v710 = vpack.c.b16 %v662, %v658
      %v711 = vpack.c.b16 %v663, %v659
      %v712 = vpack.c.b16 %v668, %v664
      %v713 = vpack.c.b16 %v669, %v665
      %v714 = vpack.c.b16 %v670, %v666
      %v715 = vpack.c.b16 %v671, %v667
      %v716 = vpack.c.b16 %v676, %v672
      %v717 = vpack.c.b16 %v677, %v673
      %v718 = vpack.c.b16 %v678, %v674
      %v719 = vpack.c.b16 %v679, %v675
      %v720 = vpack.c.b16 %v684, %v680
      %v721 = vpack.c.b16 %v685, %v681
      %v722 = vpack.c.b16 %v686, %v682
      %v723 = vpack.c.b16 %v687, %v683
      %v724 = vpack.c.b16 %v692, %v688
      %v725 = vpack.c.b16 %v693, %v689
      %v726 = vpack.c.b16 %v694, %v690
      %v727 = vpack.c.b16 %v695, %v691
      %760 = vmatprep.subr.bf16.mxu0 %v697
      %761 = vmatpush1.bf16.msra.mxu0 %v696
      %762 = vmatprep.subr.bf16.mxu0 %v701
      %763 = vmatpush1.bf16.msra.mxu0 %v700
      %764 = vmatprep.subr.bf16.mxu0 %v705
      %765 = vmatpush1.bf16.msra.mxu0 %v704
      %766 = vmatprep.subr.bf16.mxu0 %v709
      %767 = vmatpush1.bf16.msra.mxu0 %v708
      %768 = vmatprep.subr.bf16.mxu0 %v713
      %769 = vmatpush1.bf16.msra.mxu0 %v712
      %770 = vmatprep.subr.bf16.mxu0 %v717
      %771 = vmatpush1.bf16.msra.mxu0 %v716
      %772 = vmatprep.subr.bf16.mxu0 %v721
      %773 = vmatpush1.bf16.msra.mxu0 %v720
      %774 = vmatprep.subr.bf16.mxu0 %v725
      %775 = vmatpush1.bf16.msra.mxu0 %v724
      %776 = vmatprep.subr.bf16.mxu0 0
      %777 = vmatpush1.bf16.msra.mxu0 0
      %778 = vmatprep.subr.bf16.mxu0 0
      %779 = vmatpush1.bf16.msra.mxu0 0
      %780 = vmatprep.subr.bf16.mxu0 0
      %781 = vmatpush1.bf16.msra.mxu0 0
      %782 = vmatprep.subr.bf16.mxu0 0
      %783 = vmatpush1.bf16.msra.mxu0 0
      %784 = vmatprep.subr.bf16.mxu0 0
      %785 = vmatpush1.bf16.msra.mxu0 0
      %786 = vmatprep.subr.bf16.mxu0 0
      %787 = vmatpush1.bf16.msra.mxu0 0
      %788 = vmatprep.subr.bf16.mxu0 0
      %789 = vmatpush1.bf16.msra.mxu0 0
      %790 = vmatprep.subr.bf16.mxu0 0
      %791 = vmatpush1.bf16.msra.mxu0 0
      %792 = vmatprep.mubr.bf16.mxu0 0
      %793 = vmatmul.mubr.bf16.gmra.mrb[0].mxu0 %v567
      %v794 = vpop.f32.mrb[0].mxu0
      %v795 = vadd.f32 0.0, %v794
      %v796 = vpop.f32.mrb[0].mxu0
      %v797 = vadd.f32 0.0, %v796
      %v798 = vpop.f32.mrb[0].mxu0
      %v799 = vpop.f32.mrb[0].mxu0
      %800 = vdwg.mxu0
      %801 = vmatprep.subr.bf16.mxu0 %v699
      %802 = vmatpush1.bf16.msra.mxu0 %v698
      %803 = vmatprep.subr.bf16.mxu0 %v703
      %804 = vmatpush1.bf16.msra.mxu0 %v702
      %805 = vmatprep.subr.bf16.mxu0 %v707
      %806 = vmatpush1.bf16.msra.mxu0 %v706
      %807 = vmatprep.subr.bf16.mxu0 %v711
      %808 = vmatpush1.bf16.msra.mxu0 %v710
      %809 = vmatprep.subr.bf16.mxu0 %v715
      %810 = vmatpush1.bf16.msra.mxu0 %v714
      %811 = vmatprep.subr.bf16.mxu0 %v719
      %812 = vmatpush1.bf16.msra.mxu0 %v718
      %813 = vmatprep.subr.bf16.mxu0 %v723
      %814 = vmatpush1.bf16.msra.mxu0 %v722
      %815 = vmatprep.subr.bf16.mxu0 %v727
      %816 = vmatpush1.bf16.msra.mxu0 %v726
      %817 = vmatprep.subr.bf16.mxu0 0
      %818 = vmatpush1.bf16.msra.mxu0 0
      %819 = vmatprep.subr.bf16.mxu0 0
      %820 = vmatpush1.bf16.msra.mxu0 0
      %821 = vmatprep.subr.bf16.mxu0 0
      %822 = vmatpush1.bf16.msra.mxu0 0
      %823 = vmatprep.subr.bf16.mxu0 0
      %824 = vmatpush1.bf16.msra.mxu0 0
      %825 = vmatprep.subr.bf16.mxu0 0
      %826 = vmatpush1.bf16.msra.mxu0 0
      %827 = vmatprep.subr.bf16.mxu0 0
      %828 = vmatpush1.bf16.msra.mxu0 0
      %829 = vmatprep.subr.bf16.mxu0 0
      %830 = vmatpush1.bf16.msra.mxu0 0
      %831 = vmatprep.subr.bf16.mxu0 0
      %832 = vmatpush1.bf16.msra.mxu0 0
      %833 = vmatprep.mubr.bf16.mxu0 0
      %834 = vmatmul.mubr.bf16.gmra.mrb[0].mxu0 %v567
      %v835 = vpop.f32.mrb[0].mxu0
      %v836 = vadd.f32 0.0, %v835
      %v837 = vpop.f32.mrb[0].mxu0
      %v838 = vadd.f32 0.0, %v837
      %v839 = vpop.f32.mrb[0].mxu0
      %v840 = vpop.f32.mrb[0].mxu0
      %841 = vdwg.mxu0
      %v842 = vadd.f32 %v563, %v795
      %v843 = vadd.f32 %v564, %v797
      %v844 = vadd.f32 %v565, %v836
      %v845 = vadd.f32 %v566, %v838
      %v846 = vmul.f32 %v842, 0.5
      %v847 = vtanh.pop %v846
      %v848 = vmul.f32 %v847, 0.5
      %v849 = vadd.f32 %v848, 0.5
      %v850 = vmul.f32 %v843, 0.5
      %v851 = vtanh.pop %v850
      %v852 = vmul.f32 %v851, 0.5
      %v853 = vadd.f32 %v852, 0.5
      %v854 = vtanh.pop %v844
      %v855 = vmul.f32 %v845, 0.5
      %v856 = vtanh.pop %v855
      %v857 = vmul.f32 %v856, 0.5
      %v858 = vadd.f32 %v857, 0.5
      %v859 = vmul.f32 %v853, %v556
      %v860 = vmul.f32 %v849, %v854
      %v861 = vadd.f32 %v859, %v860
      %v862 = vtanh.pop %v861
      %v863 = vmul.f32 %v858, %v862
    $region54: #{tpu_custom_call.1} parent=1 // loop_footer
      %s552 = sadd.s32 %s550, 1
    $region55: #{tpu_custom_call.1} parent=1 // loop_footer_branch
      %549 = sbr.rel target = $region51
    $region56: #{tpu_custom_call.1} parent=1 // loop_exit
      _
    %v864 = vld [vmem:[%s2] sm:$0xff]
    %866 = vset.pattern.permute.xlu0 0
    %867 = vperm.xlu0 %866, %v864
    %v868 = vpop.permute.xlu0 %867
    %v870 = vmul.f32 %v555, %v868
    %v871 = vpack.c.bf16 %v870, %v870
    %v872 = vld [vmem:[#allocation10] sm:$0xff]
    %v873 = vld [vmem:[#allocation10 + $0x8] sm:$0xff]
    %v874 = vld [vmem:[#allocation10 + $0x10] sm:$0xff]
    %v875 = vld [vmem:[#allocation10 + $0x18] sm:$0xff]
    %v876 = vld [vmem:[#allocation10 + $0x20] sm:$0xff]
    %v877 = vld [vmem:[#allocation10 + $0x28] sm:$0xff]
    %v878 = vld [vmem:[#allocation10 + $0x30] sm:$0xff]
    %v879 = vld [vmem:[#allocation10 + $0x38] sm:$0xff]
    %v880 = vld [vmem:[#allocation10 + $0x40] sm:$0xff]
    %v881 = vld [vmem:[#allocation10 + $0x48] sm:$0xff]
    %v882 = vld [vmem:[#allocation10 + $0x50] sm:$0xff]
    %v883 = vld [vmem:[#allocation10 + $0x58] sm:$0xff]
    %v884 = vld [vmem:[#allocation10 + $0x60] sm:$0xff]
    %v885 = vld [vmem:[#allocation10 + $0x68] sm:$0xff]
    %v886 = vld [vmem:[#allocation10 + $0x70] sm:$0xff]
    %v887 = vld [vmem:[#allocation10 + $0x78] sm:$0xff]
    %v888 = vld [vmem:[%s7] sm:$0x3]
    %v890 = vlaneseq
    %v891 = vshrl.u32 %v890, 7
    %v892 = vsub.s32 0, %v891
    %v893 = vrot.slane %v888, %v892
    %v894 = vlaneseq
    %v895 = vshrl.u32 %v894, 7
    %v896 = vsub.s32 1, %v895
    %v897 = vrot.slane %v888, %v896
    %v916 = vunpack.c.l.b16 %v872
    %v917 = vunpack.c.h.b16 %v872
    %v918 = vunpack.c.l.b16 %v873
    %v919 = vunpack.c.h.b16 %v873
    %v920 = vunpack.c.l.b16 %v874
    %v921 = vunpack.c.h.b16 %v874
    %v922 = vunpack.c.l.b16 %v875
    %v923 = vunpack.c.h.b16 %v875
    %v924 = vunpack.c.l.b16 %v876
    %v925 = vunpack.c.h.b16 %v876
    %v926 = vunpack.c.l.b16 %v877
    %v927 = vunpack.c.h.b16 %v877
    %v928 = vunpack.c.l.b16 %v878
    %v929 = vunpack.c.h.b16 %v878
    %v930 = vunpack.c.l.b16 %v879
    %v931 = vunpack.c.h.b16 %v879
    %v932 = vunpack.c.l.b16 %v880
    %v933 = vunpack.c.h.b16 %v880
    %v934 = vunpack.c.l.b16 %v881
    %v935 = vunpack.c.h.b16 %v881
    %v936 = vunpack.c.l.b16 %v882
    %v937 = vunpack.c.h.b16 %v882
    %v938 = vunpack.c.l.b16 %v883
    %v939 = vunpack.c.h.b16 %v883
    %v940 = vunpack.c.l.b16 %v884
    %v941 = vunpack.c.h.b16 %v884
    %v942 = vunpack.c.l.b16 %v885
    %v943 = vunpack.c.h.b16 %v885
    %v944 = vunpack.c.l.b16 %v886
    %v945 = vunpack.c.h.b16 %v886
    %v946 = vunpack.c.l.b16 %v887
    %v947 = vunpack.c.h.b16 %v887
    %v948 = vpack.c.b16 %v918, %v916
    %v949 = vpack.c.b16 %v919, %v917
    %v950 = vpack.c.b16 %v922, %v920
    %v951 = vpack.c.b16 %v923, %v921
    %v952 = vpack.c.b16 %v926, %v924
    %v953 = vpack.c.b16 %v927, %v925
    %v954 = vpack.c.b16 %v930, %v928
    %v955 = vpack.c.b16 %v931, %v929
    %v956 = vpack.c.b16 %v934, %v932
    %v957 = vpack.c.b16 %v935, %v933
    %v958 = vpack.c.b16 %v938, %v936
    %v959 = vpack.c.b16 %v939, %v937
    %v960 = vpack.c.b16 %v942, %v940
    %v961 = vpack.c.b16 %v943, %v941
    %v962 = vpack.c.b16 %v946, %v944
    %v963 = vpack.c.b16 %v947, %v945
    %980 = vmatprep.subr.bf16.mxu0 %v949
    %981 = vmatpush1.bf16.msra.mxu0 %v948
    %982 = vmatprep.subr.bf16.mxu0 %v951
    %983 = vmatpush1.bf16.msra.mxu0 %v950
    %984 = vmatprep.subr.bf16.mxu0 %v953
    %985 = vmatpush1.bf16.msra.mxu0 %v952
    %986 = vmatprep.subr.bf16.mxu0 %v955
    %987 = vmatpush1.bf16.msra.mxu0 %v954
    %988 = vmatprep.subr.bf16.mxu0 %v957
    %989 = vmatpush1.bf16.msra.mxu0 %v956
    %990 = vmatprep.subr.bf16.mxu0 %v959
    %991 = vmatpush1.bf16.msra.mxu0 %v958
    %992 = vmatprep.subr.bf16.mxu0 %v961
    %993 = vmatpush1.bf16.msra.mxu0 %v960
    %994 = vmatprep.subr.bf16.mxu0 %v963
    %995 = vmatpush1.bf16.msra.mxu0 %v962
    %996 = vmatprep.subr.bf16.mxu0 0
    %997 = vmatpush1.bf16.msra.mxu0 0
    %998 = vmatprep.subr.bf16.mxu0 0
    %999 = vmatpush1.bf16.msra.mxu0 0
    %1000 = vmatprep.subr.bf16.mxu0 0
    %1001 = vmatpush1.bf16.msra.mxu0 0
    %1002 = vmatprep.subr.bf16.mxu0 0
    %1003 = vmatpush1.bf16.msra.mxu0 0
    %1004 = vmatprep.subr.bf16.mxu0 0
    %1005 = vmatpush1.bf16.msra.mxu0 0
    %1006 = vmatprep.subr.bf16.mxu0 0
    %1007 = vmatpush1.bf16.msra.mxu0 0
    %1008 = vmatprep.subr.bf16.mxu0 0
    %1009 = vmatpush1.bf16.msra.mxu0 0
    %1010 = vmatprep.subr.bf16.mxu0 0
    %1011 = vmatpush1.bf16.msra.mxu0 0
    %1012 = vmatprep.mubr.bf16.mxu0 0
    %1013 = vmatmul.mubr.bf16.gmra.mrb[0].mxu0 %v871
    %v1014 = vpop.f32.mrb[0].mxu0
    %v1015 = vadd.f32 %v893, %v1014
    %v1016 = vpop.f32.mrb[0].mxu0
    %v1017 = vadd.f32 %v897, %v1016
    %v1018 = vpop.f32.mrb[0].mxu0
    %v1019 = vpop.f32.mrb[0].mxu0
    %1020 = vdwg.mxu0
    %v1021 = vmax.f32 %v1015, %v1017
    %1022 = vmax.xlane.f32.xlu0 %v1021
    %v1023 = vpop.xlane.xlu0 %1022
    %v1024 = vsub.f32 %v1015, %v1023
    %v1025 = vsub.f32 %v1017, %v1023
    %v1026 = vmul.f32 %v1024, 1.442695
    %v1027 = vpow.pop %v1026
    %v1028 = vmul.f32 %v1025, 1.442695
    %v1029 = vpow.pop %v1028
    %v1030 = vadd.f32 %v1027, %v1029
    %1031 = vadd.xlane.f32.xlu0 %v1030
    %v1032 = vpop.xlane.xlu0 %1031
    %v1033 = vrcp.pop %v1032
    %v1034 = vmul.f32 %v1032, %v1033
    %v1035 = vsub.f32 2.0, %v1034
    %v1036 = vmul.f32 %v1033, %v1035
    %v1037 = vmul.f32 %v1027, %v1036
    %v1038 = vmul.f32 %v1029, %v1036
    %1039 = vst [vmem:[#allocation12] sm:$0xff] %v1037
    %1040 = vst [vmem:[#allocation12 + $0x8] sm:$0xff] %v1038
    // Predicated region
    $region57: #{tpu_custom_call.1} parent=1 // pred_check
      _
    $region58: #{tpu_custom_call.1} parent=1 // pred_check_branch
      %1042 = sbr.rel (0) target = $region60
    $region59: #{tpu_custom_call.1} parent=1 // pred_region
      %s1044 = ssub.s32 256, 256
      %1045 = vsyncadd [#allocation6], %s1044
      %s1047 = sshll.u32 [#allocation12], 4
      %s1048 = int_to_ptr.vmem [resolvable:$true] %s1047
      %1050 = dma.vmem_to_hbm [thread:$0]  %s1048, 256, %s8, [#allocation6]
    $region60: #{tpu_custom_call.1} parent=1 // pred_fallthru
      _
    // Predicated region
    $region61: #{tpu_custom_call.1} parent=1 // pred_check
      _
    $region62: #{tpu_custom_call.1} parent=1 // pred_check_branch
      %1052 = sbr.rel (0) target = $region64
    $region63: #{tpu_custom_call.1} parent=1 // pred_region
      %1053 = dma.done [#allocation6], 256
    $region64: #{tpu_custom_call.1} parent=1 // pred_fallthru
      _
    %1054 = vsyncpa [#allocation5], 1
    %1055 = vsyncpa [#allocation8], 1
    %1056 = vsyncpa [#allocation11], 1
    %1057 = vsyncpa [#allocation6], 1

</llo_original>
